<compile_context>
chip_gen: v7x
topology: tpu7x:2x2x1
jax: 0.10.0
libtpu: 0.0.40
codegen_flags: <defaults>
</compile_context>

<pallas_src>
import functools

import jax
import jax.numpy as jnp
from jax.experimental import pallas as pl
from jax.experimental.pallas import tpu as pltpu

_LANE = 128


def _round_up(x, m):
    return ((x + m - 1) // m) * m


def _vmem_capacity_bytes():
    try:
        info = pltpu.get_tpu_info()
        cap = getattr(info, "vmem_capacity_bytes", None)
        if cap:
            return int(cap)
    except Exception:
        pass
    return 64 * 1024 * 1024  # conservative (v7x-class) default


def _choose_tiles(batch, k_total, out_dim, w_itemsize, xk_itemsize,
                  weight_budget_bytes, two_tc):
    """Pick (tile_k, tile_out) for the streamed (B, K) @ (K, out) matmul.

    tile_out: lane-dense multiple of 128 (or the full out_dim when out_dim < 256); on 2-TC
              parts it is capped at ~half the 128-rounded out so the "parallel" axis has
              work for both TensorCores.
    tile_k:   full K when the double-buffered stream fits the budget (no ragged K, single xk
              DMA), otherwise the largest multiple of 128 whose per-step stream
              (weight slab + xk slab, x2 buffers) fits the budget.
    """
    if out_dim < 2 * _LANE:
        tile_out = out_dim                                   # single full-extent tile
    else:
        cap = 2048
        if two_tc:
            out_128 = _round_up(out_dim, _LANE)
            cap = min(cap, max(_LANE, ((out_128 // 2) // _LANE) * _LANE))
        tile_out = max(_LANE, min(cap, (out_dim // _LANE) * _LANE))

    stream_bytes_per_row = 2 * (tile_out * w_itemsize + batch * xk_itemsize)
    if k_total * stream_bytes_per_row <= weight_budget_bytes:
        tile_k = k_total                                     # no K tiling
    else:
        tile_k = weight_budget_bytes // stream_bytes_per_row
        tile_k = max(_LANE, (tile_k // _LANE) * _LANE)
    return tile_k, tile_out


def _comp_fc_kernel(xk_ref, w_ref, bf_ref, o_ref, acc_ref, *,
                    activation, k_total, tile_k, k_ragged):
    k = pl.program_id(1)   # reduction over K = n * in_dim (innermost grid axis)

    @pl.when(k == 0)
    def _():
        # Seed the accumulator with the hoisted bias term (comp_weight @ bias) for this out tile.
        acc_ref[...] = bf_ref[...].astype(jnp.float32)

    w = w_ref[...]
    if k_ragged:
        # Last K tile over-hangs the weight array: the DMA only fills the valid rows and the
        # rest of the VMEM buffer is stale garbage.  Zero it so (possibly NaN) garbage never
        # reaches the accumulator.  (xk is zero-padded in the wrapper, so valid xk columns only
        # ever meet valid weight rows.)  Only emitted when K % tile_k != 0.
        valid = k_total - k * tile_k
        rows = jax.lax.broadcasted_iota(jnp.int32, w.shape, 0)
        w = jnp.where(rows < valid, w, jnp.zeros_like(w))

    # (B, tile_k) @ (tile_k, tile_out) on the MXU, f32 accumulation (native bf16 dot when the
    # parameter is stored in bf16).
    acc_ref[...] += jnp.dot(xk_ref[...], w, preferred_element_type=jnp.float32)

    @pl.when(k == pl.num_programs(1) - 1)
    def _():
        res = acc_ref[...]
        if activation:
            res = jnp.maximum(res, 0.0)
        o_ref[...] = res.astype(o_ref.dtype)


def compositional_fc(x, comp_weight, weight, bias, activation=True, *, _force_tiles=None):
    """x: (B, in), comp_weight: (B, n), weight: (n, in, out), bias: (n, out).

    For the bandwidth-optimal fast path, store `weight` in bf16 once (outside any hot loop);
    the kernel streams it as-is and accumulates in f32.
    """
    B, in_dim = x.shape
    n, in_dim_w, out_dim = weight.shape
    assert in_dim_w == in_dim
    assert comp_weight.shape == (B, n)
    assert bias.shape == (n, out_dim)

    K = n * in_dim
    w2 = weight.reshape(K, out_dim)                 # contiguous reshape: free, no HBM copy
    w_itemsize = jnp.dtype(w2.dtype).itemsize

    # Composition scale folded into the (tiny) input:  xk[b, k*in+i] = cw[b,k] * x[b,i].
    xk = (comp_weight.astype(jnp.float32)[:, :, None]
          * x.astype(jnp.float32)[:, None, :]).reshape(B, K)
    xk = xk.astype(w2.dtype)                        # native-dtype MXU dot with the streamed weights
    xk_itemsize = jnp.dtype(xk.dtype).itemsize

    # Bias term hoisted out of the reduction:  bias_fold = comp_weight @ bias   (B, out), f32.
    bias_fold = jnp.dot(comp_weight.astype(jnp.float32), bias.astype(jnp.float32))

    # Generation-aware VMEM budget (v7x-class parts have 64 MiB VMEM and 2 TensorCores).
    vmem_cap = _vmem_capacity_bytes()
    small_vmem = vmem_cap <= 72 * 1024 * 1024
    two_tc = small_vmem
    weight_budget = (14 if small_vmem else 48) * 1024 * 1024

    if _force_tiles is not None:
        tile_k, tile_out = _force_tiles
    else:
        tile_k, tile_out = _choose_tiles(B, K, out_dim, w_itemsize, xk_itemsize,
                                         weight_budget, two_tc)

    num_j = -(-out_dim // tile_out)
    num_k = -(-K // tile_k)
    k_ragged = (num_k > 1) and (K % tile_k != 0)

    # Zero-pad the tiny xk so a ragged last K tile never reads out-of-bounds garbage.
    K_pad = num_k * tile_k
    if K_pad != K:
        xk = jnp.pad(xk, ((0, 0), (0, K_pad - K)))

    # VMEM use estimate (double-buffered streams + acc scratch) -> limit with headroom.
    est = (2 * min(tile_k, K) * tile_out * w_itemsize      # weight stream
           + 2 * B * tile_k * xk_itemsize                  # xk stream
           + 2 * B * tile_out * 4                          # bias_fold
           + 2 * B * tile_out * jnp.dtype(x.dtype).itemsize  # output
           + B * tile_out * 4)                             # accumulator scratch
    vmem_limit = max(int(est * 1.5) + (4 << 20), 16 << 20)
    vmem_limit = min(vmem_limit, (40 << 20) if small_vmem else (96 << 20))

    kernel = functools.partial(_comp_fc_kernel, activation=activation,
                               k_total=K, tile_k=tile_k, k_ragged=k_ragged)

    out = pl.pallas_call(
        kernel,
        out_shape=jax.ShapeDtypeStruct((B, out_dim), x.dtype),
        grid_spec=pltpu.PrefetchScalarGridSpec(
            num_scalar_prefetch=0,
            grid=(num_j, num_k),                       # j (parallel) outer, k (reduction) inner
            in_specs=[
                pl.BlockSpec((B, tile_k), lambda j, k: (0, k)),          # xk (tiny stream)
                pl.BlockSpec((tile_k, tile_out), lambda j, k: (k, j)),   # weight: the HBM stream
                pl.BlockSpec((B, tile_out), lambda j, k: (0, j)),        # bias fold
            ],
            out_specs=pl.BlockSpec((B, tile_out), lambda j, k: (0, j)),
            scratch_shapes=[pltpu.VMEM((B, tile_out), jnp.float32)],
        ),
        compiler_params=pltpu.CompilerParams(
            dimension_semantics=("parallel", "arbitrary"),
            vmem_limit_bytes=vmem_limit,
        ),
    )(xk, w2, bias_fold)

    return out


def compositional_fc_ref(x, comp_weight, weight, bias, activation=True):
    # Pure-JAX reference matching the PyTorch forward.
    z = jnp.einsum("bi,kio->kbo", x, weight) + bias[:, None, :]     # (n, B, out)
    z = jnp.einsum("bk,kbo->bo", comp_weight, z)                    # (B, out)
    if activation:
        z = jnp.maximum(z, 0.0)
    return z


if __name__ == "__main__":
    # Case 1+2: the module's nominal small shapes (f32 exact path, bf16 streaming fast path).
    B, in_dim, out_dim, n = 8, 32, 32, 4
    key = jax.random.PRNGKey(0)
    k1, k2, k3, k4 = jax.random.split(key, 4)

    weight = jax.random.uniform(k1, (n, in_dim, out_dim), dtype=jnp.float32)  # torch.rand
    bias = jax.random.uniform(k2, (n, out_dim), dtype=jnp.float32)
    x = jax.random.normal(k3, (B, in_dim), dtype=jnp.float32)
    comp_weight = jax.random.uniform(k4, (B, n), dtype=jnp.float32)

    ref = compositional_fc_ref(x, comp_weight, weight, bias, activation=True)

    out = jax.block_until_ready(compositional_fc(x, comp_weight, weight, bias, activation=True))
    assert out.shape == (B, out_dim)
    assert jnp.allclose(out, ref, atol=1e-4, rtol=1e-4), "f32 path mismatch vs reference"

    # bf16 weight streaming: parameter cast ONCE outside the wrapper (fast path).
    weight_bf16 = weight.astype(jnp.bfloat16)
    out_bf = jax.block_until_ready(
        compositional_fc(x, comp_weight, weight_bf16, bias, activation=True))
    assert jnp.allclose(out_bf, ref, atol=5e-2, rtol=5e-2), "bf16 path mismatch vs reference"

    # Case 3: force small tiles to exercise the K-tiled / ragged-boundary machinery
    # (ragged last K tile with in-kernel mask, ragged last out tile with masked write-back).
    B2, in2, out2, n2 = 8, 48, 200, 5
    kk = jax.random.split(jax.random.PRNGKey(1), 4)
    w2 = jax.random.uniform(kk[0], (n2, in2, out2), dtype=jnp.float32)
    b2 = jax.random.uniform(kk[1], (n2, out2), dtype=jnp.float32)
    x2 = jax.random.normal(kk[2], (B2, in2), dtype=jnp.float32)
    cw2 = jax.random.uniform(kk[3], (B2, n2), dtype=jnp.float32)
    ref2 = compositional_fc_ref(x2, cw2, w2, b2, activation=True)
    out2a = jax.block_until_ready(
        compositional_fc(x2, cw2, w2, b2, activation=True, _force_tiles=(128, 128)))
    assert out2a.shape == (B2, out2)
    assert jnp.allclose(out2a, ref2, atol=1e-4, rtol=1e-4), "tiled/ragged path mismatch"

    print("KERNEL_OK")
</pallas_src>

<mosaic_0001>
module attributes {stable_mosaic.version = 11 : i64} {
  func.func @_comp_fc_kernel(%arg0: i32, %arg1: i32, %arg2: memref<8x128xf32, #tpu.memory_space<vmem>>, %arg3: memref<128x32xf32, #tpu.memory_space<vmem>>, %arg4: memref<8x32xf32, #tpu.memory_space<vmem>>, %arg5: memref<8x32xf32, #tpu.memory_space<vmem>>, %arg6: memref<8x32xf32, #tpu.memory_space<vmem>>) attributes {dimension_semantics = [#tpu.dimension_semantics<parallel>, #tpu.dimension_semantics<arbitrary>], iteration_bounds = array<i64: 1, 1>, scalar_prefetch = 0 : i64, scratch_operands = 1 : i64, tpu.core_type = #tpu.core_type<tc>, window_params = [{transform_indices = @transform_0, window_bounds = array<i64: 8, 128>}, {transform_indices = @transform_1, window_bounds = array<i64: 128, 32>}, {transform_indices = @transform_2, window_bounds = array<i64: 8, 32>}, {transform_indices = @transform_3, window_bounds = array<i64: 8, 32>}]} {
    %c0_i32 = arith.constant 0 : i32
    %0 = arith.cmpi eq, %arg1, %c0_i32 : i32
    %1 = arith.extui %0 : i1 to i32
    %c0_i32_0 = arith.constant 0 : i32
    %2 = arith.cmpi ne, %1, %c0_i32_0 : i32
    scf.if %2 {
      %c0_10 = arith.constant 0 : index
      %c0_11 = arith.constant 0 : index
      %12 = vector.load %arg4[%c0_10, %c0_11] : memref<8x32xf32, #tpu.memory_space<vmem>>, vector<8x32xf32>
      %c0_12 = arith.constant 0 : index
      %c0_13 = arith.constant 0 : index
      %13 = vector.load %arg6[%c0_12, %c0_13] : memref<8x32xf32, #tpu.memory_space<vmem>>, vector<8x32xf32>
      tpu.vector_store %arg6[%c0_12, %c0_13], %12 {strides = array<i32>} : memref<8x32xf32, #tpu.memory_space<vmem>>, vector<8x32xf32>,
    } else {
    }
    %c0 = arith.constant 0 : index
    %c0_1 = arith.constant 0 : index
    %3 = vector.load %arg3[%c0, %c0_1] : memref<128x32xf32, #tpu.memory_space<vmem>>, vector<128x32xf32>
    %c0_2 = arith.constant 0 : index
    %c0_3 = arith.constant 0 : index
    %4 = vector.load %arg6[%c0_2, %c0_3] : memref<8x32xf32, #tpu.memory_space<vmem>>, vector<8x32xf32>
    %c0_4 = arith.constant 0 : index
    %c0_5 = arith.constant 0 : index
    %5 = vector.load %arg2[%c0_4, %c0_5] : memref<8x128xf32, #tpu.memory_space<vmem>>, vector<8x128xf32>
    %cst = arith.constant dense<0.000000e+00> : vector<8x32xf32>
    %6 = tpu.matmul %5, %3, %cst {dimension_numbers = #tpu.dot_dimension_numbers<[1], [0], [0], [1], [0, 0, 1, 1], [], []>} : vector<8x128xf32>, vector<128x32xf32>, vector<8x32xf32> -> vector<8x32xf32>
    %7 = arith.addf %4, %6 : vector<8x32xf32>
    %c0_6 = arith.constant 0 : index
    %c0_7 = arith.constant 0 : index
    %8 = vector.load %arg6[%c0_6, %c0_7] : memref<8x32xf32, #tpu.memory_space<vmem>>, vector<8x32xf32>
    tpu.vector_store %arg6[%c0_6, %c0_7], %7 {strides = array<i32>} : memref<8x32xf32, #tpu.memory_space<vmem>>, vector<8x32xf32>,
    %c0_i32_8 = arith.constant 0 : i32
    %9 = arith.cmpi eq, %arg1, %c0_i32_8 : i32
    %10 = arith.extui %9 : i1 to i32
    %c0_i32_9 = arith.constant 0 : i32
    %11 = arith.cmpi ne, %10, %c0_i32_9 : i32
    scf.if %11 {
      %c0_10 = arith.constant 0 : index
      %c0_11 = arith.constant 0 : index
      %12 = vector.load %arg6[%c0_10, %c0_11] : memref<8x32xf32, #tpu.memory_space<vmem>>, vector<8x32xf32>
      %cst_12 = arith.constant 0.000000e+00 : f32
      %13 = vector.broadcast %cst_12 : f32 to vector<8x32xf32>
      %14 = arith.maximumf %12, %13 : vector<8x32xf32>
      %c0_13 = arith.constant 0 : index
      %c0_14 = arith.constant 0 : index
      %15 = vector.load %arg5[%c0_13, %c0_14] : memref<8x32xf32, #tpu.memory_space<vmem>>, vector<8x32xf32>
      tpu.vector_store %arg5[%c0_13, %c0_14], %14 {strides = array<i32>} : memref<8x32xf32, #tpu.memory_space<vmem>>, vector<8x32xf32>,
    } else {
    }
    return
  }
  func.func @transform_0(%arg0: i32, %arg1: i32) -> (i32, i32) {
    %c0_i32 = arith.constant 0 : i32
    %c0_i32_0 = arith.constant 0 : i32
    return %c0_i32, %arg1 : i32, i32
  }
  func.func @transform_1(%arg0: i32, %arg1: i32) -> (i32, i32) {
    %c0_i32 = arith.constant 0 : i32
    return %arg1, %arg0 : i32, i32
  }
  func.func @transform_2(%arg0: i32, %arg1: i32) -> (i32, i32) {
    %c0_i32 = arith.constant 0 : i32
    %c0_i32_0 = arith.constant 0 : i32
    return %c0_i32, %arg0 : i32, i32
  }
  func.func @transform_3(%arg0: i32, %arg1: i32) -> (i32, i32) {
    %c0_i32 = arith.constant 0 : i32
    %c0_i32_0 = arith.constant 0 : i32
    return %c0_i32, %arg0 : i32, i32
  }
}

</mosaic_0001>

<llo_original>
// kernel: tpu_custom_call.1
$region0: #{tpu_custom_call.1}
  #allocation0 [shape = 'u32[]', space=smem, size = 0x4, offset = 0x4, fixed_abs, tag = 'smem constant byte address 0x4 - core index']
  #allocation1 [shape = 'u32[144,128]{1,0:T(1,128)}', space=vmem, size = 0x12000, scoped, tag = 'internal scratch']
  #allocation2 [shape = 'f32[8,32]{1,0:T(8,128)}', space=vmem, size = 0x1000, scoped, tag = 'scratch operand']
  %s0 = inlined_call_operand.vmem [shape: f32[8,128], index: 0, kind: input, shape index: {}]
  %s1 = inlined_call_operand.vmem [shape: f32[128,32], index: 1, kind: input, shape index: {}]
  %s2 = inlined_call_operand.vmem [shape: f32[8,32], index: 2, kind: input, shape index: {}]
  %s3 = inlined_call_operand.hbm [shape: f32[8,32], index: 3, kind: output, shape index: {}]
  %s4 = sld [smem:[#allocation0]]
  $region30: #{tpu_custom_call.1} parent=0
    _
  %s6 = ssub.s32 1, %s4
  %s7 = scalar_select 0, %s6, %s4
  $region1: #{tpu_custom_call.1} parent=0
    #allocation3 [shape = 'u8[4096]{0}', space=vmem, size = 0x1000, scoped, tag = 'output window, operand 0, single buffered']
    #allocation4 [shape = 's32[1]{0}', space=sflag, size = 0x4, scoped, tag = 'scoped memory for tpu_custom_call.1']
    %8 = vsyncpa [#allocation4], 0
    // Predicated region
    $region2: #{tpu_custom_call.1} parent=1 // pred_check
      _
    $region3: #{tpu_custom_call.1} parent=1 // pred_check_branch
      %10 = sbr.rel (0) target = $region5
    $region4: #{tpu_custom_call.1} parent=1 // pred_region
      _
    $region5: #{tpu_custom_call.1} parent=1 // pred_fallthru
      _
    // Predicated region
    $region6: #{tpu_custom_call.1} parent=1 // pred_check
      _
    $region7: #{tpu_custom_call.1} parent=1 // pred_check_branch
      %12 = sbr.rel (0) target = $region9
    $region8: #{tpu_custom_call.1} parent=1 // pred_region
      _
    $region9: #{tpu_custom_call.1} parent=1 // pred_fallthru
      _
    // Predicated region
    $region10: #{tpu_custom_call.1} parent=1 // pred_check
      _
    $region11: #{tpu_custom_call.1} parent=1 // pred_check_branch
      %14 = sbr.rel (0) target = $region13
    $region12: #{tpu_custom_call.1} parent=1 // pred_region
      _
    $region13: #{tpu_custom_call.1} parent=1 // pred_fallthru
      _
    %p15 = scmp.eq.s32.totalorder 0, 0
    // Predicated region
    $region14: #{tpu_custom_call.1} parent=1 // pred_check
      %p16 = pneg %p15
    $region15: #{tpu_custom_call.1} parent=1 // pred_check_branch
      %18 = sbr.rel (%p16) target = $region17
    $region16: #{tpu_custom_call.1} parent=1 // pred_region
      %v19 = vld [vmem:[%s2] sm:$0xff]
      %vm20 = vcmask 261120
      %21 = vst.msk [vmem:[#allocation2] sm:$0xff] %vm20, %v19
    $region17: #{tpu_custom_call.1} parent=1 // pred_fallthru
      _
    %v22 = vld [vmem:[%s1] sm:$0xff]
    %v23 = vld [vmem:[%s1 + $0x8] sm:$0xff]
    %v24 = vld [vmem:[%s1 + $0x10] sm:$0xff]
    %v25 = vld [vmem:[%s1 + $0x18] sm:$0xff]
    %v26 = vld [vmem:[%s1 + $0x20] sm:$0xff]
    %v27 = vld [vmem:[%s1 + $0x28] sm:$0xff]
    %v28 = vld [vmem:[%s1 + $0x30] sm:$0xff]
    %v29 = vld [vmem:[%s1 + $0x38] sm:$0xff]
    %v30 = vld [vmem:[%s1 + $0x40] sm:$0xff]
    %v31 = vld [vmem:[%s1 + $0x48] sm:$0xff]
    %v32 = vld [vmem:[%s1 + $0x50] sm:$0xff]
    %v33 = vld [vmem:[%s1 + $0x58] sm:$0xff]
    %v34 = vld [vmem:[%s1 + $0x60] sm:$0xff]
    %v35 = vld [vmem:[%s1 + $0x68] sm:$0xff]
    %v36 = vld [vmem:[%s1 + $0x70] sm:$0xff]
    %v37 = vld [vmem:[%s1 + $0x78] sm:$0xff]
    %v38 = vld [vmem:[#allocation2] sm:$0xff]
    %v39 = vld [vmem:[%s0] sm:$0xff]
    %40 = vmatprep.subr.mxu0 0.0
    %41 = vmatpush1.msra.mxu0 %v22
    %42 = vmatprep.subr.mxu0 0.0
    %43 = vmatpush1.msra.mxu0 %v23
    %44 = vmatprep.subr.mxu0 0.0
    %45 = vmatpush1.msra.mxu0 %v24
    %46 = vmatprep.subr.mxu0 0.0
    %47 = vmatpush1.msra.mxu0 %v25
    %48 = vmatprep.subr.mxu0 0.0
    %49 = vmatpush1.msra.mxu0 %v26
    %50 = vmatprep.subr.mxu0 0.0
    %51 = vmatpush1.msra.mxu0 %v27
    %52 = vmatprep.subr.mxu0 0.0
    %53 = vmatpush1.msra.mxu0 %v28
    %54 = vmatprep.subr.mxu0 0.0
    %55 = vmatpush1.msra.mxu0 %v29
    %56 = vmatprep.subr.mxu0 0.0
    %57 = vmatpush1.msra.mxu0 %v30
    %58 = vmatprep.subr.mxu0 0.0
    %59 = vmatpush1.msra.mxu0 %v31
    %60 = vmatprep.subr.mxu0 0.0
    %61 = vmatpush1.msra.mxu0 %v32
    %62 = vmatprep.subr.mxu0 0.0
    %63 = vmatpush1.msra.mxu0 %v33
    %64 = vmatprep.subr.mxu0 0.0
    %65 = vmatpush1.msra.mxu0 %v34
    %66 = vmatprep.subr.mxu0 0.0
    %67 = vmatpush1.msra.mxu0 %v35
    %68 = vmatprep.subr.mxu0 0.0
    %69 = vmatpush1.msra.mxu0 %v36
    %70 = vmatprep.subr.mxu0 0.0
    %71 = vmatpush1.msra.mxu0 %v37
    %72 = vmatprep.subr.mxu0 0.0
    %73 = vmatpush1.msra.mxu0 0.0
    %74 = vmatprep.subr.mxu0 0.0
    %75 = vmatpush1.msra.mxu0 0.0
    %76 = vmatprep.subr.mxu0 0.0
    %77 = vmatpush1.msra.mxu0 0.0
    %78 = vmatprep.subr.mxu0 0.0
    %79 = vmatpush1.msra.mxu0 0.0
    %80 = vmatprep.subr.mxu0 0.0
    %81 = vmatpush1.msra.mxu0 0.0
    %82 = vmatprep.subr.mxu0 0.0
    %83 = vmatpush1.msra.mxu0 0.0
    %84 = vmatprep.subr.mxu0 0.0
    %85 = vmatpush1.msra.mxu0 0.0
    %86 = vmatprep.subr.mxu0 0.0
    %87 = vmatpush1.msra.mxu0 0.0
    %88 = vmatprep.subr.mxu0 0.0
    %89 = vmatpush1.msra.mxu0 0.0
    %90 = vmatprep.subr.mxu0 0.0
    %91 = vmatpush1.msra.mxu0 0.0
    %92 = vmatprep.subr.mxu0 0.0
    %93 = vmatpush1.msra.mxu0 0.0
    %94 = vmatprep.subr.mxu0 0.0
    %95 = vmatpush1.msra.mxu0 0.0
    %96 = vmatprep.subr.mxu0 0.0
    %97 = vmatpush1.msra.mxu0 0.0
    %98 = vmatprep.subr.mxu0 0.0
    %99 = vmatpush1.msra.mxu0 0.0
    %100 = vmatprep.subr.mxu0 0.0
    %101 = vmatpush1.msra.mxu0 0.0
    %102 = vmatprep.subr.mxu0 0.0
    %103 = vmatpush1.msra.mxu0 0.0
    %104 = vmatprep.mubr.f32.mxu0 0.0
    %105 = vmatmul.mubr.f32.gmra.mrb[0].mxu0 %v39
    %v106 = vpop.f32.mrb[0].mxu0
    %v107 = vadd.f32 0.0, %v106
    %v108 = vpop.f32.mrb[0].mxu0
    %109 = vdwg.mxu0
    %v110 = vadd.f32 %v38, %v107
    %vm111 = vcmask 261120
    %112 = vst.msk [vmem:[#allocation2] sm:$0xff] %vm111, %v110
    // Predicated region
    $region18: #{tpu_custom_call.1} parent=1 // pred_check
      %p113 = pneg %p15
    $region19: #{tpu_custom_call.1} parent=1 // pred_check_branch
      %115 = sbr.rel (%p113) target = $region21
    $region20: #{tpu_custom_call.1} parent=1 // pred_region
      %v116 = vld [vmem:[#allocation2] sm:$0xff]
      %v117 = vmax.f32 %v116, 0.0
      %118 = vst.msk [vmem:[#allocation3] sm:$0xff] %vm111, %v117
    $region21: #{tpu_custom_call.1} parent=1 // pred_fallthru
      _
    // Predicated region
    $region22: #{tpu_custom_call.1} parent=1 // pred_check
      _
    $region23: #{tpu_custom_call.1} parent=1 // pred_check_branch
      %120 = sbr.rel (0) target = $region25
    $region24: #{tpu_custom_call.1} parent=1 // pred_region
      %s122 = ssub.s32 128, 128
      %123 = vsyncadd [#allocation4], %s122
      %s125 = sshll.u32 [#allocation3], 4
      %s126 = int_to_ptr.vmem [resolvable:$true] %s125
      %128 = dma.vmem_to_hbm [thread:$0]  %s126, 128, %s3, [#allocation4]
    $region25: #{tpu_custom_call.1} parent=1 // pred_fallthru
      _
    // Predicated region
    $region26: #{tpu_custom_call.1} parent=1 // pred_check
      _
    $region27: #{tpu_custom_call.1} parent=1 // pred_check_branch
      %130 = sbr.rel (0) target = $region29
    $region28: #{tpu_custom_call.1} parent=1 // pred_region
      %131 = dma.done [#allocation4], 128
    $region29: #{tpu_custom_call.1} parent=1 // pred_fallthru
      _
    %132 = vsyncpa [#allocation4], 1

</llo_original>
